<compile_context>
chip_gen: v7x
topology: tpu7x:2x2x1
jax: 0.10.0
libtpu: 0.0.40
codegen_flags: <defaults>
</compile_context>

<pallas_src>
import jax
import jax.numpy as jnp
from jax.experimental import pallas as pl
from jax.experimental.pallas import tpu as pltpu


def _conv1x1_kernel(w_ref, x_ref, o_ref):
    # w_ref: (co_blk, C_in)   x_ref: (1, C_in, HW_pad)   o_ref: (1, co_blk, HW_pad)
    o_ref[0] = jnp.dot(
        w_ref[...], x_ref[0], preferred_element_type=jnp.float32
    ).astype(o_ref.dtype)


def conv2d_1x1(x_nchw, weight):
    """1x1 stride-1 conv, no bias.

    x_nchw : (N, C_in, H, W)
    weight : (C_out, C_in, 1, 1)
    returns: (N, C_out, H, W)
    """
    N, C_in, H, W = x_nchw.shape
    C_out = weight.shape[0]
    HW = H * W

    # Free layout changes only — no transposes anywhere in the wrapper.
    x_mat = x_nchw.reshape(N, C_in, HW)          # (N, C_in, HW)
    w_mat = weight.reshape(C_out, C_in)          # (C_out, C_in)

    # Pad the pixel (lane) dim to a multiple of 128 -> fully unmasked stores.
    HW_pad = ((HW + 127) // 128) * 128
    if HW_pad != HW:
        x_mat = jnp.pad(x_mat, ((0, 0), (0, 0), (0, HW_pad - HW)))

    # Split C_out two ways (parallel grid axis) so v7x's 2 TensorCores share
    # the work; harmless on v5e/v6e.  Each half keeps the sublane multiple-of-8
    # constraint (32 rows) and a full 640-wide lane-dense output block.
    n_j = 2 if (C_out % 16 == 0) else 1
    co_blk = C_out // n_j

    out = pl.pallas_call(
        _conv1x1_kernel,
        out_shape=jax.ShapeDtypeStruct((N, C_out, HW_pad), x_nchw.dtype),
        grid_spec=pltpu.PrefetchScalarGridSpec(
            num_scalar_prefetch=0,
            grid=(N, n_j),
            in_specs=[
                pl.BlockSpec((co_blk, C_in), lambda n, j: (j, 0)),
                pl.BlockSpec((1, C_in, HW_pad), lambda n, j: (n, 0, 0)),
            ],
            out_specs=pl.BlockSpec((1, co_blk, HW_pad), lambda n, j: (n, j, 0)),
        ),
        compiler_params=pltpu.CompilerParams(
            dimension_semantics=("parallel", "parallel")),
    )(w_mat, x_mat)

    if HW_pad != HW:
        out = out[:, :, :HW]
    # (N, C_out, H*W) -> NCHW, free reshape.
    return out.reshape(N, C_out, H, W)


if __name__ == "__main__":
    key = jax.random.PRNGKey(0)
    kx, kw = jax.random.split(key)

    # Shapes implied by the module: Conv2d(256, 64, 1x1), input (1, 256, 25, 25)
    N, C_in, H, W = 1, 256, 25, 25
    C_out = 64

    x = jax.random.normal(kx, (N, C_in, H, W), dtype=jnp.float32)
    w = jax.random.normal(kw, (C_out, C_in, 1, 1), dtype=jnp.float32) * 0.05

    y = conv2d_1x1(x, w)
    jax.block_until_ready(y)

    # Sanity check against a plain-JAX reference (per-pixel channel matmul).
    y_ref = jnp.einsum("nchw,oc->nohw", x, w.reshape(C_out, C_in))
    assert y.shape == (N, C_out, H, W)
    assert jnp.allclose(y, y_ref, atol=1e-3, rtol=1e-3)

    print("KERNEL_OK")
</pallas_src>

<mosaic_0001>
module attributes {stable_mosaic.version = 11 : i64} {
  func.func @_conv1x1_kernel(%arg0: i32, %arg1: i32, %arg2: memref<32x256xf32, #tpu.memory_space<vmem>>, %arg3: memref<1x256x640xf32, #tpu.memory_space<vmem>>, %arg4: memref<1x32x640xf32, #tpu.memory_space<vmem>>) attributes {dimension_semantics = [#tpu.dimension_semantics<parallel>, #tpu.dimension_semantics<parallel>], iteration_bounds = array<i64: 1, 2>, scalar_prefetch = 0 : i64, scratch_operands = 0 : i64, tpu.core_type = #tpu.core_type<tc>, window_params = [{transform_indices = @transform_0, window_bounds = array<i64: 32, 256>}, {transform_indices = @transform_1, window_bounds = array<i64: 1, 256, 640>}, {transform_indices = @transform_2, window_bounds = array<i64: 1, 32, 640>}]} {
    %c0 = arith.constant 0 : index
    %c0_0 = arith.constant 0 : index
    %0 = vector.load %arg2[%c0, %c0_0] : memref<32x256xf32, #tpu.memory_space<vmem>>, vector<32x256xf32>
    %c0_1 = arith.constant 0 : index
    %c0_2 = arith.constant 0 : index
    %c0_3 = arith.constant 0 : index
    %1 = vector.load %arg3[%c0_1, %c0_2, %c0_3] : memref<1x256x640xf32, #tpu.memory_space<vmem>>, vector<1x256x640xf32>
    %2 = vector.shape_cast %1 : vector<1x256x640xf32> to vector<256x640xf32>
    %cst = arith.constant dense<0.000000e+00> : vector<32x640xf32>
    %3 = tpu.matmul %0, %2, %cst {dimension_numbers = #tpu.dot_dimension_numbers<[1], [0], [0], [1], [0, 0, 1, 1], [], []>} : vector<32x256xf32>, vector<256x640xf32>, vector<32x640xf32> -> vector<32x640xf32>
    %c0_4 = arith.constant 0 : index
    %c0_5 = arith.constant 0 : index
    %c0_6 = arith.constant 0 : index
    %4 = vector.load %arg4[%c0_4, %c0_5, %c0_6] : memref<1x32x640xf32, #tpu.memory_space<vmem>>, vector<1x32x640xf32>
    %5 = vector.shape_cast %4 : vector<1x32x640xf32> to vector<32x640xf32>
    %6 = vector.shape_cast %3 : vector<32x640xf32> to vector<1x32x640xf32>
    tpu.vector_store %arg4[%c0_4, %c0_5, %c0_6], %6 {strides = array<i32>} : memref<1x32x640xf32, #tpu.memory_space<vmem>>, vector<1x32x640xf32>,
    return
  }
  func.func @transform_0(%arg0: i32, %arg1: i32) -> (i32, i32) {
    %c0_i32 = arith.constant 0 : i32
    %c0_i32_0 = arith.constant 0 : i32
    return %arg1, %c0_i32 : i32, i32
  }
  func.func @transform_1(%arg0: i32, %arg1: i32) -> (i32, i32, i32) {
    %c0_i32 = arith.constant 0 : i32
    %c0_i32_0 = arith.constant 0 : i32
    %c0_i32_1 = arith.constant 0 : i32
    return %arg0, %c0_i32, %c0_i32_0 : i32, i32, i32
  }
  func.func @transform_2(%arg0: i32, %arg1: i32) -> (i32, i32, i32) {
    %c0_i32 = arith.constant 0 : i32
    %c0_i32_0 = arith.constant 0 : i32
    return %arg0, %arg1, %c0_i32 : i32, i32, i32
  }
}

</mosaic_0001>

<llo_original>
// kernel: tpu_custom_call.1
$region0: #{tpu_custom_call.1}
  #allocation0 [shape = 'u32[]', space=smem, size = 0x4, offset = 0x4, fixed_abs, tag = 'smem constant byte address 0x4 - core index']
  #allocation1 [shape = 'u32[144,128]{1,0:T(1,128)}', space=vmem, size = 0x12000, scoped, tag = 'internal scratch']
  %s0 = inlined_call_operand.hbm [shape: f32[64,256], index: 0, kind: input, shape index: {}]
  %s1 = inlined_call_operand.hbm [shape: f32[1,256,640], index: 1, kind: input, shape index: {}]
  %s2 = inlined_call_operand.hbm [shape: f32[1,64,640], index: 2, kind: output, shape index: {}]
  %s3 = sld [smem:[#allocation0]]
  $region49: #{tpu_custom_call.1} parent=0
    _
  %s5 = ssub.s32 1, %s3
  %s6 = scalar_select 0, %s5, %s3
  $region1: #{tpu_custom_call.1} parent=0
    #allocation2 [shape = 'u8[65536]{0}', space=vmem, size = 0x10000, scoped, tag = 'input window, operand 0']
    #allocation3 [shape = 's32[2]{0}', space=sflag, size = 0x8, scoped, tag = 'scoped memory for tpu_custom_call.1']
    #allocation4 [shape = 's32[2]{0}', space=sflag, size = 0x8, scoped, tag = 'scoped memory for tpu_custom_call.1']
    #allocation5 [shape = 'u8[655360]{0}', space=vmem, size = 0xa0000, scoped, tag = 'input window, operand 1, single buffered']
    #allocation6 [shape = 's32[1]{0}', space=sflag, size = 0x4, scoped, tag = 'scoped memory for tpu_custom_call.1']
    #allocation7 [shape = 'u8[163840]{0}', space=vmem, size = 0x28000, scoped, tag = 'output window, operand 0']
    %7 = vsyncpa [#allocation3], 0
    %s8 = scalar_lea.sflag [#allocation3], 1
    %9 = vsyncpa %s8, 0
    %10 = vsyncpa [#allocation6], 0
    %11 = vsyncpa [#allocation4], 0
    %s12 = scalar_lea.sflag [#allocation4], 1
    %13 = vsyncpa %s12, 0
    loop: start=0, step=1, limit=4
    $region2: #{tpu_custom_call.1} parent=1 // loop_pre_header
      _
    $region3: #{tpu_custom_call.1} parent=1 // loop_header
      %s15 = sphi 0, %s19
      %p16 = scmp.ge.s32.totalorder %s15, 4
      %s22 = sphi 0, %s34
      %s23 = sphi 0, %s30
      %s24 = sphi 0, %s22
      %s25 = sphi 0, %s23
      %s26 = sphi 0, %s24
      %s27 = sphi 0, %s25
      %s37 = sphi 0, %s39
      %s40 = sphi 0, %s37
      %s41 = sphi 0, %s40
      %s57 = sphi 0, %s41
      %s63 = sphi 0, %s65
      %s66 = sphi 0, %s63
      %s67 = sphi 0, %s66
      %s83 = sphi 0, %s67
      %s91 = sphi 0, %s93
      %s94 = sphi 0, %s91
      %s95 = sphi 0, %s94
      %s111 = sphi 0, %s95
    $region4: #{tpu_custom_call.1} parent=1 // loop_header_branch
      %18 = sbr.rel (%p16) target = $region8
    $region5: #{tpu_custom_call.1} parent=1 // loop_body
      %s20 = ssub.s32 %s15, 1
      %s21 = ssub.s32 %s15, 2
      %s28 = sadd.s32 1, %s23
      %p29 = scmp.ge.s32.totalorder %s28, 2
      %s30 = scalar_select %p29, 0, %s28
      %s31 = sadd.s32 1, %s22
      %s32 = scalar_select %p29, %s31, %s22
      %p33 = scmp.ge.s32.totalorder %s32, 1
      %s34 = scalar_select %p33, 0, %s32
      %s35 = ssub.s32 %s23, %s30
      %p36 = scmp.eq.s32.totalorder %s35, 0
      %s38 = sadd.s32 %s37, 1
      %s39 = scalar_select %p36, %s37, %s38
      %p42 = pneg %p36
      %p43 = scmp.eq.s32.totalorder %s15, 1
      %p44 = por %p42, %p43
      %p45 = scmp.ne.s32.totalorder %s37, %s40
      %p46 = scmp.eq.s32.totalorder %s15, 0
      %p47 = por %p45, %p46
      %p48 = scmp.ne.s32.totalorder %s37, %s40
      %p49 = scmp.eq.s32.totalorder %s20, 1
      %p50 = por %p48, %p49
      %p51 = scmp.ne.s32.totalorder %s40, %s41
      %p52 = scmp.eq.s32.totalorder %s20, 0
      %p53 = por %p51, %p52
      %p54 = scmp.ne.s32.totalorder %s40, %s41
      %p55 = scmp.eq.s32.totalorder %s21, 1
      %p56 = por %p54, %p55
      %p58 = scmp.ne.s32.totalorder %s41, %s57
      %p59 = scmp.eq.s32.totalorder %s21, 0
      %p60 = por %p58, %p59
      %s61 = ssub.s32 %s22, %s34
      %p62 = scmp.eq.s32.totalorder %s61, 0
      %s64 = sadd.s32 %s63, 1
      %s65 = scalar_select %p62, %s63, %s64
      %p68 = pneg %p62
      %p69 = scmp.eq.s32.totalorder %s15, 1
      %p70 = por %p68, %p69
      %p71 = scmp.ne.s32.totalorder %s63, %s66
      %p72 = scmp.eq.s32.totalorder %s15, 0
      %p73 = por %p71, %p72
      %p74 = scmp.ne.s32.totalorder %s63, %s66
      %p75 = scmp.eq.s32.totalorder %s20, 1
      %p76 = por %p74, %p75
      %p77 = scmp.ne.s32.totalorder %s66, %s67
      %p78 = scmp.eq.s32.totalorder %s20, 0
      %p79 = por %p77, %p78
      %p80 = scmp.ne.s32.totalorder %s66, %s67
      %p81 = scmp.eq.s32.totalorder %s21, 1
      %p82 = por %p80, %p81
      %p84 = scmp.ne.s32.totalorder %s67, %s83
      %p85 = scmp.eq.s32.totalorder %s21, 0
      %p86 = por %p84, %p85
      %s87 = ssub.s32 %s22, %s34
      %s88 = ssub.s32 %s23, %s30
      %s89 = sor.u32 %s87, %s88
      %p90 = scmp.eq.s32.totalorder %s89, 0
      %s92 = sadd.s32 %s91, 1
      %s93 = scalar_select %p90, %s91, %s92
      %p96 = pneg %p90
      %p97 = scmp.eq.s32.totalorder %s15, 1
      %p98 = por %p96, %p97
      %p99 = scmp.ne.s32.totalorder %s91, %s94
      %p100 = scmp.eq.s32.totalorder %s15, 0
      %p101 = por %p99, %p100
      %p102 = scmp.ne.s32.totalorder %s91, %s94
      %p103 = scmp.eq.s32.totalorder %s20, 1
      %p104 = por %p102, %p103
      %p105 = scmp.ne.s32.totalorder %s94, %s95
      %p106 = scmp.eq.s32.totalorder %s20, 0
      %p107 = por %p105, %p106
      %p108 = scmp.ne.s32.totalorder %s94, %s95
      %p109 = scmp.eq.s32.totalorder %s21, 1
      %p110 = por %p108, %p109
      %p112 = scmp.ne.s32.totalorder %s95, %s111
      %p113 = scmp.eq.s32.totalorder %s21, 0
      %p114 = por %p112, %p113
      %p115 = scmp.le.s32.totalorder 1, %s15
      %p116 = scmp.lt.s32.totalorder %s15, 3
      %p117 = pnand %p115, %p116
      %p118 = pneg %p117
      // Predicated region
      $region9: #{tpu_custom_call.1} parent=5 // pred_check
        _
      $region10: #{tpu_custom_call.1} parent=5 // pred_check_branch
        %120 = sbr.rel (%p117) target = $region12
      $region11: #{tpu_custom_call.1} parent=5 // pred_region
        %s121 = ssub.s32 %s15, 1
        // Predicated region
        $region13: #{tpu_custom_call.1} parent=11 // pred_check
          %p122 = pneg %p79
        $region14: #{tpu_custom_call.1} parent=11 // pred_check_branch
          %124 = sbr.rel (%p122) target = $region16
        $region15: #{tpu_custom_call.1} parent=11 // pred_region
          %s126 = ssub.s32 20480, 20480
          %127 = vsyncadd [#allocation6], %s126
          %s128 = smul.addr %s24, 160
          %s129 = smul.addr %s128, 128
          %s130 = scalar_lea.hbm %s1, %s129
          %s131 = sshll.u32 [#allocation5], 4
          %s132 = int_to_ptr.vmem [resolvable:$true] %s131
          %137 = dma.hbm_to_vmem [thread:$0]  %s130, 20480, %s132, [#allocation6], 640, 640, 40
        $region16: #{tpu_custom_call.1} parent=11 // pred_fallthru
          _
      $region12: #{tpu_custom_call.1} parent=5 // pred_fallthru
        _
      %p138 = scmp.lt.s32.totalorder %s15, 2
      // Predicated region
      $region17: #{tpu_custom_call.1} parent=5 // pred_check
        %p139 = pneg %p138
      $region18: #{tpu_custom_call.1} parent=5 // pred_check_branch
        %141 = sbr.rel (%p139) target = $region20
      $region19: #{tpu_custom_call.1} parent=5 // pred_region
        // Predicated region
        $region21: #{tpu_custom_call.1} parent=19 // pred_check
          %p142 = pneg %p47
        $region22: #{tpu_custom_call.1} parent=19 // pred_check_branch
          %144 = sbr.rel (%p142) target = $region24
        $region23: #{tpu_custom_call.1} parent=19 // pred_region
          %s145 = sand.u32 %s37, 1
          %s146 = scalar_lea.sflag [#allocation3], %s145
          %s147 = sand.u32 %s37, 1
          %s148 = smul.addr %s147, 64
          %s149 = scalar_lea.vmem [#allocation2], %s148
          %s150 = smul.u32 4, %s23
          %s152 = ssub.s32 1024, 1024
          %153 = vsyncadd %s146, %s152
          %s154 = smul.addr %s150, 2
          %s155 = smul.addr %s154, 128
          %s156 = scalar_lea.hbm %s0, %s155
          %s157 = sshll.u32 %s149, 4
          %s158 = int_to_ptr.vmem [resolvable:$true] %s157
          %163 = dma.hbm_to_vmem [thread:$0]  %s156, 1024, %s158, %s146, 256, 256, 16
        $region24: #{tpu_custom_call.1} parent=19 // pred_fallthru
          _
      $region20: #{tpu_custom_call.1} parent=5 // pred_fallthru
        _
      %p164 = scmp.le.s32.totalorder 1, %s15
      %p165 = scmp.lt.s32.totalorder %s15, 3
      %p166 = pnand %p164, %p165
      %p167 = pneg %p166
      // Predicated region
      $region25: #{tpu_custom_call.1} parent=5 // pred_check
        _
      $region26: #{tpu_custom_call.1} parent=5 // pred_check_branch
        %169 = sbr.rel (%p166) target = $region28
      $region27: #{tpu_custom_call.1} parent=5 // pred_region
        %s170 = ssub.s32 %s15, 1
        %s171 = sand.u32 %s40, 1
        %s172 = scalar_lea.sflag [#allocation3], %s171
        %s173 = sand.u32 %s40, 1
        %s174 = smul.addr %s173, 64
        %s175 = scalar_lea.vmem [#allocation2], %s174
        // Predicated region
        $region29: #{tpu_custom_call.1} parent=27 // pred_check
          %p176 = pneg %p53
        $region30: #{tpu_custom_call.1} parent=27 // pred_check_branch
          %178 = sbr.rel (%p176) target = $region32
        $region31: #{tpu_custom_call.1} parent=27 // pred_region
          %179 = dma.done %s172, 1024
        $region32: #{tpu_custom_call.1} parent=27 // pred_fallthru
          _
        // Predicated region
        $region33: #{tpu_custom_call.1} parent=27 // pred_check
          %p180 = pneg %p79
        $region34: #{tpu_custom_call.1} parent=27 // pred_check_branch
          %182 = sbr.rel (%p180) target = $region36
        $region35: #{tpu_custom_call.1} parent=27 // pred_region
          %183 = dma.done [#allocation6], 20480
        $region36: #{tpu_custom_call.1} parent=27 // pred_fallthru
          _
        %s184 = sand.u32 %s40, 1
        %s185 = scalar_lea.sflag [#allocation3], %s184
        %s186 = sand.u32 %s40, 1
        %s187 = smul.addr %s186, 64
        %s188 = scalar_lea.vmem [#allocation2], %s187
        %p189 = pneg %p53
        %p190 = pneg %p50
        %p191 = pneg %p79
        %p192 = pneg %p76
        %p193 = pneg %p107
        %p194 = pneg %p104
        %s195 = sand.u32 %s94, 1
        %s196 = scalar_lea.sflag [#allocation4], %s195
        %s197 = sand.u32 %s94, 1
        %s198 = smul.addr %s197, 160
        %s199 = scalar_lea.vmem [#allocation7], %s198
        %s200 = smul.u32 4, %s25
        %s201 = smul.u32 4, %s25
        %v202 = vld [vmem:[%s175] sm:$0xff]
        %v203 = vld [vmem:[%s175 + $0x8] sm:$0xff]
        %v204 = vld [vmem:[%s175 + $0x10] sm:$0xff]
        %v205 = vld [vmem:[%s175 + $0x18] sm:$0xff]
        %v206 = vld [vmem:[%s175 + $0x20] sm:$0xff]
        %v207 = vld [vmem:[%s175 + $0x28] sm:$0xff]
        %v208 = vld [vmem:[%s175 + $0x30] sm:$0xff]
        %v209 = vld [vmem:[%s175 + $0x38] sm:$0xff]
        %v210 = vld [vmem:[#allocation5] sm:$0xff]
        %v211 = vld [vmem:[#allocation5 + $0x8] sm:$0xff]
        %v212 = vld [vmem:[#allocation5 + $0x10] sm:$0xff]
        %v213 = vld [vmem:[#allocation5 + $0x18] sm:$0xff]
        %v214 = vld [vmem:[#allocation5 + $0x20] sm:$0xff]
        %v215 = vld [vmem:[#allocation5 + $0x28] sm:$0xff]
        %v216 = vld [vmem:[#allocation5 + $0x30] sm:$0xff]
        %v217 = vld [vmem:[#allocation5 + $0x38] sm:$0xff]
        %v218 = vld [vmem:[#allocation5 + $0x40] sm:$0xff]
        %v219 = vld [vmem:[#allocation5 + $0x48] sm:$0xff]
        %v220 = vld [vmem:[#allocation5 + $0x50] sm:$0xff]
        %v221 = vld [vmem:[#allocation5 + $0x58] sm:$0xff]
        %v222 = vld [vmem:[#allocation5 + $0x60] sm:$0xff]
        %v223 = vld [vmem:[#allocation5 + $0x68] sm:$0xff]
        %v224 = vld [vmem:[#allocation5 + $0x70] sm:$0xff]
        %v225 = vld [vmem:[#allocation5 + $0x78] sm:$0xff]
        %v226 = vld [vmem:[#allocation5 + $0x80] sm:$0xff]
        %v227 = vld [vmem:[#allocation5 + $0x88] sm:$0xff]
        %v228 = vld [vmem:[#allocation5 + $0x90] sm:$0xff]
        %v229 = vld [vmem:[#allocation5 + $0x98] sm:$0xff]
        %v230 = vld [vmem:[#allocation5 + $0xa0] sm:$0xff]
        %v231 = vld [vmem:[#allocation5 + $0xa8] sm:$0xff]
        %v232 = vld [vmem:[#allocation5 + $0xb0] sm:$0xff]
        %v233 = vld [vmem:[#allocation5 + $0xb8] sm:$0xff]
        %v234 = vld [vmem:[#allocation5 + $0xc0] sm:$0xff]
        %v235 = vld [vmem:[#allocation5 + $0xc8] sm:$0xff]
        %v236 = vld [vmem:[#allocation5 + $0xd0] sm:$0xff]
        %v237 = vld [vmem:[#allocation5 + $0xd8] sm:$0xff]
        %v238 = vld [vmem:[#allocation5 + $0xe0] sm:$0xff]
        %v239 = vld [vmem:[#allocation5 + $0xe8] sm:$0xff]
        %v240 = vld [vmem:[#allocation5 + $0xf0] sm:$0xff]
        %v241 = vld [vmem:[#allocation5 + $0xf8] sm:$0xff]
        %v242 = vld [vmem:[#allocation5 + $0x100] sm:$0xff]
        %v243 = vld [vmem:[#allocation5 + $0x108] sm:$0xff]
        %v244 = vld [vmem:[#allocation5 + $0x110] sm:$0xff]
        %v245 = vld [vmem:[#allocation5 + $0x118] sm:$0xff]
        %v246 = vld [vmem:[#allocation5 + $0x120] sm:$0xff]
        %v247 = vld [vmem:[#allocation5 + $0x128] sm:$0xff]
        %v248 = vld [vmem:[#allocation5 + $0x130] sm:$0xff]
        %v249 = vld [vmem:[#allocation5 + $0x138] sm:$0xff]
        %v250 = vld [vmem:[#allocation5 + $0x140] sm:$0xff]
        %v251 = vld [vmem:[#allocation5 + $0x148] sm:$0xff]
        %v252 = vld [vmem:[#allocation5 + $0x150] sm:$0xff]
        %v253 = vld [vmem:[#allocation5 + $0x158] sm:$0xff]
        %v254 = vld [vmem:[#allocation5 + $0x160] sm:$0xff]
        %v255 = vld [vmem:[#allocation5 + $0x168] sm:$0xff]
        %v256 = vld [vmem:[#allocation5 + $0x170] sm:$0xff]
        %v257 = vld [vmem:[#allocation5 + $0x178] sm:$0xff]
        %v258 = vld [vmem:[#allocation5 + $0x180] sm:$0xff]
        %v259 = vld [vmem:[#allocation5 + $0x188] sm:$0xff]
        %v260 = vld [vmem:[#allocation5 + $0x190] sm:$0xff]
        %v261 = vld [vmem:[#allocation5 + $0x198] sm:$0xff]
        %v262 = vld [vmem:[#allocation5 + $0x1a0] sm:$0xff]
        %v263 = vld [vmem:[#allocation5 + $0x1a8] sm:$0xff]
        %v264 = vld [vmem:[#allocation5 + $0x1b0] sm:$0xff]
        %v265 = vld [vmem:[#allocation5 + $0x1b8] sm:$0xff]
        %v266 = vld [vmem:[#allocation5 + $0x1c0] sm:$0xff]
        %v267 = vld [vmem:[#allocation5 + $0x1c8] sm:$0xff]
        %v268 = vld [vmem:[#allocation5 + $0x1d0] sm:$0xff]
        %v269 = vld [vmem:[#allocation5 + $0x1d8] sm:$0xff]
        %v270 = vld [vmem:[#allocation5 + $0x1e0] sm:$0xff]
        %v271 = vld [vmem:[#allocation5 + $0x1e8] sm:$0xff]
        %v272 = vld [vmem:[#allocation5 + $0x1f0] sm:$0xff]
        %v273 = vld [vmem:[#allocation5 + $0x1f8] sm:$0xff]
        %v274 = vld [vmem:[#allocation5 + $0x200] sm:$0xff]
        %v275 = vld [vmem:[#allocation5 + $0x208] sm:$0xff]
        %v276 = vld [vmem:[#allocation5 + $0x210] sm:$0xff]
        %v277 = vld [vmem:[#allocation5 + $0x218] sm:$0xff]
        %v278 = vld [vmem:[#allocation5 + $0x220] sm:$0xff]
        %v279 = vld [vmem:[#allocation5 + $0x228] sm:$0xff]
        %v280 = vld [vmem:[#allocation5 + $0x230] sm:$0xff]
        %v281 = vld [vmem:[#allocation5 + $0x238] sm:$0xff]
        %v282 = vld [vmem:[#allocation5 + $0x240] sm:$0xff]
        %v283 = vld [vmem:[#allocation5 + $0x248] sm:$0xff]
        %v284 = vld [vmem:[#allocation5 + $0x250] sm:$0xff]
        %v285 = vld [vmem:[#allocation5 + $0x258] sm:$0xff]
        %v286 = vld [vmem:[#allocation5 + $0x260] sm:$0xff]
        %v287 = vld [vmem:[#allocation5 + $0x268] sm:$0xff]
        %v288 = vld [vmem:[#allocation5 + $0x270] sm:$0xff]
        %v289 = vld [vmem:[#allocation5 + $0x278] sm:$0xff]
        %v290 = vld [vmem:[#allocation5 + $0x280] sm:$0xff]
        %v291 = vld [vmem:[#allocation5 + $0x288] sm:$0xff]
        %v292 = vld [vmem:[#allocation5 + $0x290] sm:$0xff]
        %v293 = vld [vmem:[#allocation5 + $0x298] sm:$0xff]
        %v294 = vld [vmem:[#allocation5 + $0x2a0] sm:$0xff]
        %v295 = vld [vmem:[#allocation5 + $0x2a8] sm:$0xff]
        %v296 = vld [vmem:[#allocation5 + $0x2b0] sm:$0xff]
        %v297 = vld [vmem:[#allocation5 + $0x2b8] sm:$0xff]
        %v298 = vld [vmem:[#allocation5 + $0x2c0] sm:$0xff]
        %v299 = vld [vmem:[#allocation5 + $0x2c8] sm:$0xff]
        %v300 = vld [vmem:[#allocation5 + $0x2d0] sm:$0xff]
        %v301 = vld [vmem:[#allocation5 + $0x2d8] sm:$0xff]
        %v302 = vld [vmem:[#allocation5 + $0x2e0] sm:$0xff]
        %v303 = vld [vmem:[#allocation5 + $0x2e8] sm:$0xff]
        %v304 = vld [vmem:[#allocation5 + $0x2f0] sm:$0xff]
        %v305 = vld [vmem:[#allocation5 + $0x2f8] sm:$0xff]
        %v306 = vld [vmem:[#allocation5 + $0x300] sm:$0xff]
        %v307 = vld [vmem:[#allocation5 + $0x308] sm:$0xff]
        %v308 = vld [vmem:[#allocation5 + $0x310] sm:$0xff]
        %v309 = vld [vmem:[#allocation5 + $0x318] sm:$0xff]
        %v310 = vld [vmem:[#allocation5 + $0x320] sm:$0xff]
        %v311 = vld [vmem:[#allocation5 + $0x328] sm:$0xff]
        %v312 = vld [vmem:[#allocation5 + $0x330] sm:$0xff]
        %v313 = vld [vmem:[#allocation5 + $0x338] sm:$0xff]
        %v314 = vld [vmem:[#allocation5 + $0x340] sm:$0xff]
        %v315 = vld [vmem:[#allocation5 + $0x348] sm:$0xff]
        %v316 = vld [vmem:[#allocation5 + $0x350] sm:$0xff]
        %v317 = vld [vmem:[#allocation5 + $0x358] sm:$0xff]
        %v318 = vld [vmem:[#allocation5 + $0x360] sm:$0xff]
        %v319 = vld [vmem:[#allocation5 + $0x368] sm:$0xff]
        %v320 = vld [vmem:[#allocation5 + $0x370] sm:$0xff]
        %v321 = vld [vmem:[#allocation5 + $0x378] sm:$0xff]
        %v322 = vld [vmem:[#allocation5 + $0x380] sm:$0xff]
        %v323 = vld [vmem:[#allocation5 + $0x388] sm:$0xff]
        %v324 = vld [vmem:[#allocation5 + $0x390] sm:$0xff]
        %v325 = vld [vmem:[#allocation5 + $0x398] sm:$0xff]
        %v326 = vld [vmem:[#allocation5 + $0x3a0] sm:$0xff]
        %v327 = vld [vmem:[#allocation5 + $0x3a8] sm:$0xff]
        %v328 = vld [vmem:[#allocation5 + $0x3b0] sm:$0xff]
        %v329 = vld [vmem:[#allocation5 + $0x3b8] sm:$0xff]
        %v330 = vld [vmem:[#allocation5 + $0x3c0] sm:$0xff]
        %v331 = vld [vmem:[#allocation5 + $0x3c8] sm:$0xff]
        %v332 = vld [vmem:[#allocation5 + $0x3d0] sm:$0xff]
        %v333 = vld [vmem:[#allocation5 + $0x3d8] sm:$0xff]
        %v334 = vld [vmem:[#allocation5 + $0x3e0] sm:$0xff]
        %v335 = vld [vmem:[#allocation5 + $0x3e8] sm:$0xff]
        %v336 = vld [vmem:[#allocation5 + $0x3f0] sm:$0xff]
        %v337 = vld [vmem:[#allocation5 + $0x3f8] sm:$0xff]
        %v338 = vld [vmem:[#allocation5 + $0x400] sm:$0xff]
        %v339 = vld [vmem:[#allocation5 + $0x408] sm:$0xff]
        %v340 = vld [vmem:[#allocation5 + $0x410] sm:$0xff]
        %v341 = vld [vmem:[#allocation5 + $0x418] sm:$0xff]
        %v342 = vld [vmem:[#allocation5 + $0x420] sm:$0xff]
        %v343 = vld [vmem:[#allocation5 + $0x428] sm:$0xff]
        %v344 = vld [vmem:[#allocation5 + $0x430] sm:$0xff]
        %v345 = vld [vmem:[#allocation5 + $0x438] sm:$0xff]
        %v346 = vld [vmem:[#allocation5 + $0x440] sm:$0xff]
        %v347 = vld [vmem:[#allocation5 + $0x448] sm:$0xff]
        %v348 = vld [vmem:[#allocation5 + $0x450] sm:$0xff]
        %v349 = vld [vmem:[#allocation5 + $0x458] sm:$0xff]
        %v350 = vld [vmem:[#allocation5 + $0x460] sm:$0xff]
        %v351 = vld [vmem:[#allocation5 + $0x468] sm:$0xff]
        %v352 = vld [vmem:[#allocation5 + $0x470] sm:$0xff]
        %v353 = vld [vmem:[#allocation5 + $0x478] sm:$0xff]
        %v354 = vld [vmem:[#allocation5 + $0x480] sm:$0xff]
        %v355 = vld [vmem:[#allocation5 + $0x488] sm:$0xff]
        %v356 = vld [vmem:[#allocation5 + $0x490] sm:$0xff]
        %v357 = vld [vmem:[#allocation5 + $0x498] sm:$0xff]
        %v358 = vld [vmem:[#allocation5 + $0x4a0] sm:$0xff]
        %v359 = vld [vmem:[#allocation5 + $0x4a8] sm:$0xff]
        %v360 = vld [vmem:[#allocation5 + $0x4b0] sm:$0xff]
        %v361 = vld [vmem:[#allocation5 + $0x4b8] sm:$0xff]
        %v362 = vld [vmem:[#allocation5 + $0x4c0] sm:$0xff]
        %v363 = vld [vmem:[#allocation5 + $0x4c8] sm:$0xff]
        %v364 = vld [vmem:[#allocation5 + $0x4d0] sm:$0xff]
        %v365 = vld [vmem:[#allocation5 + $0x4d8] sm:$0xff]
        %v366 = vld [vmem:[#allocation5 + $0x4e0] sm:$0xff]
        %v367 = vld [vmem:[#allocation5 + $0x4e8] sm:$0xff]
        %v368 = vld [vmem:[#allocation5 + $0x4f0] sm:$0xff]
        %v369 = vld [vmem:[#allocation5 + $0x4f8] sm:$0xff]
        %370 = vmatprep.subr.mxu0 %v211
        %371 = vmatpush1.msra.mxu0 %v210
        %372 = vmatprep.subr.mxu0 %v216
        %373 = vmatpush1.msra.mxu0 %v215
        %374 = vmatprep.subr.mxu0 %v221
        %375 = vmatpush1.msra.mxu0 %v220
        %376 = vmatprep.subr.mxu0 %v226
        %377 = vmatpush1.msra.mxu0 %v225
        %378 = vmatprep.subr.mxu0 %v231
        %379 = vmatpush1.msra.mxu0 %v230
        %380 = vmatprep.subr.mxu0 %v236
        %381 = vmatpush1.msra.mxu0 %v235
        %382 = vmatprep.subr.mxu0 %v241
        %383 = vmatpush1.msra.mxu0 %v240
        %384 = vmatprep.subr.mxu0 %v246
        %385 = vmatpush1.msra.mxu0 %v245
        %386 = vmatprep.subr.mxu0 %v251
        %387 = vmatpush1.msra.mxu0 %v250
        %388 = vmatprep.subr.mxu0 %v256
        %389 = vmatpush1.msra.mxu0 %v255
        %390 = vmatprep.subr.mxu0 %v261
        %391 = vmatpush1.msra.mxu0 %v260
        %392 = vmatprep.subr.mxu0 %v266
        %393 = vmatpush1.msra.mxu0 %v265
        %394 = vmatprep.subr.mxu0 %v271
        %395 = vmatpush1.msra.mxu0 %v270
        %396 = vmatprep.subr.mxu0 %v276
        %397 = vmatpush1.msra.mxu0 %v275
        %398 = vmatprep.subr.mxu0 %v281
        %399 = vmatpush1.msra.mxu0 %v280
        %400 = vmatprep.subr.mxu0 %v286
        %401 = vmatpush1.msra.mxu0 %v285
        %402 = vmatprep.subr.mxu0 %v291
        %403 = vmatpush1.msra.mxu0 %v290
        %404 = vmatprep.subr.mxu0 %v296
        %405 = vmatpush1.msra.mxu0 %v295
        %406 = vmatprep.subr.mxu0 %v301
        %407 = vmatpush1.msra.mxu0 %v300
        %408 = vmatprep.subr.mxu0 %v306
        %409 = vmatpush1.msra.mxu0 %v305
        %410 = vmatprep.subr.mxu0 %v311
        %411 = vmatpush1.msra.mxu0 %v310
        %412 = vmatprep.subr.mxu0 %v316
        %413 = vmatpush1.msra.mxu0 %v315
        %414 = vmatprep.subr.mxu0 %v321
        %415 = vmatpush1.msra.mxu0 %v320
        %416 = vmatprep.subr.mxu0 %v326
        %417 = vmatpush1.msra.mxu0 %v325
        %418 = vmatprep.subr.mxu0 %v331
        %419 = vmatpush1.msra.mxu0 %v330
        %420 = vmatprep.subr.mxu0 %v336
        %421 = vmatpush1.msra.mxu0 %v335
        %422 = vmatprep.subr.mxu0 %v341
        %423 = vmatpush1.msra.mxu0 %v340
        %424 = vmatprep.subr.mxu0 %v346
        %425 = vmatpush1.msra.mxu0 %v345
        %426 = vmatprep.subr.mxu0 %v351
        %427 = vmatpush1.msra.mxu0 %v350
        %428 = vmatprep.subr.mxu0 %v356
        %429 = vmatpush1.msra.mxu0 %v355
        %430 = vmatprep.subr.mxu0 %v361
        %431 = vmatpush1.msra.mxu0 %v360
        %432 = vmatprep.subr.mxu0 %v366
        %433 = vmatpush1.msra.mxu0 %v365
        %434 = vmatprep.mubr.f32.mxu0 %v203
        %435 = vmatmul.mubr.f32.gmra.mrb[0].mxu0 %v202
        %v436 = vpop.f32.mrb[0].mxu0
        %v437 = vadd.f32 0.0, %v436
        %v438 = vpop.f32.mrb[0].mxu0
        %v439 = vadd.f32 0.0, %v438
        %440 = vmatprep.mubr.f32.mxu0 %v205
        %441 = vmatmul.mubr.f32.gmra.mrb[0].mxu0 %v204
        %v442 = vpop.f32.mrb[0].mxu0
        %v443 = vadd.f32 0.0, %v442
        %v444 = vpop.f32.mrb[0].mxu0
        %v445 = vadd.f32 0.0, %v444
        %446 = vmatprep.mubr.f32.mxu0 %v207
        %447 = vmatmul.mubr.f32.gmra.mrb[0].mxu0 %v206
        %v448 = vpop.f32.mrb[0].mxu0
        %v449 = vadd.f32 0.0, %v448
        %v450 = vpop.f32.mrb[0].mxu0
        %v451 = vadd.f32 0.0, %v450
        %452 = vmatprep.mubr.f32.mxu0 %v209
        %453 = vmatmul.mubr.f32.gmra.mrb[0].mxu0 %v208
        %v454 = vpop.f32.mrb[0].mxu0
        %v455 = vadd.f32 0.0, %v454
        %v456 = vpop.f32.mrb[0].mxu0
        %v457 = vadd.f32 0.0, %v456
        %458 = vdwg.mxu0
        %459 = vmatprep.subr.mxu0 %v213
        %460 = vmatpush1.msra.mxu0 %v212
        %461 = vmatprep.subr.mxu0 %v218
        %462 = vmatpush1.msra.mxu0 %v217
        %463 = vmatprep.subr.mxu0 %v223
        %464 = vmatpush1.msra.mxu0 %v222
        %465 = vmatprep.subr.mxu0 %v228
        %466 = vmatpush1.msra.mxu0 %v227
        %467 = vmatprep.subr.mxu0 %v233
        %468 = vmatpush1.msra.mxu0 %v232
        %469 = vmatprep.subr.mxu0 %v238
        %470 = vmatpush1.msra.mxu0 %v237
        %471 = vmatprep.subr.mxu0 %v243
        %472 = vmatpush1.msra.mxu0 %v242
        %473 = vmatprep.subr.mxu0 %v248
        %474 = vmatpush1.msra.mxu0 %v247
        %475 = vmatprep.subr.mxu0 %v253
        %476 = vmatpush1.msra.mxu0 %v252
        %477 = vmatprep.subr.mxu0 %v258
        %478 = vmatpush1.msra.mxu0 %v257
        %479 = vmatprep.subr.mxu0 %v263
        %480 = vmatpush1.msra.mxu0 %v262
        %481 = vmatprep.subr.mxu0 %v268
        %482 = vmatpush1.msra.mxu0 %v267
        %483 = vmatprep.subr.mxu0 %v273
        %484 = vmatpush1.msra.mxu0 %v272
        %485 = vmatprep.subr.mxu0 %v278
        %486 = vmatpush1.msra.mxu0 %v277
        %487 = vmatprep.subr.mxu0 %v283
        %488 = vmatpush1.msra.mxu0 %v282
        %489 = vmatprep.subr.mxu0 %v288
        %490 = vmatpush1.msra.mxu0 %v287
        %491 = vmatprep.subr.mxu0 %v293
        %492 = vmatpush1.msra.mxu0 %v292
        %493 = vmatprep.subr.mxu0 %v298
        %494 = vmatpush1.msra.mxu0 %v297
        %495 = vmatprep.subr.mxu0 %v303
        %496 = vmatpush1.msra.mxu0 %v302
        %497 = vmatprep.subr.mxu0 %v308
        %498 = vmatpush1.msra.mxu0 %v307
        %499 = vmatprep.subr.mxu0 %v313
        %500 = vmatpush1.msra.mxu0 %v312
        %501 = vmatprep.subr.mxu0 %v318
        %502 = vmatpush1.msra.mxu0 %v317
        %503 = vmatprep.subr.mxu0 %v323
        %504 = vmatpush1.msra.mxu0 %v322
        %505 = vmatprep.subr.mxu0 %v328
        %506 = vmatpush1.msra.mxu0 %v327
        %507 = vmatprep.subr.mxu0 %v333
        %508 = vmatpush1.msra.mxu0 %v332
        %509 = vmatprep.subr.mxu0 %v338
        %510 = vmatpush1.msra.mxu0 %v337
        %511 = vmatprep.subr.mxu0 %v343
        %512 = vmatpush1.msra.mxu0 %v342
        %513 = vmatprep.subr.mxu0 %v348
        %514 = vmatpush1.msra.mxu0 %v347
        %515 = vmatprep.subr.mxu0 %v353
        %516 = vmatpush1.msra.mxu0 %v352
        %517 = vmatprep.subr.mxu0 %v358
        %518 = vmatpush1.msra.mxu0 %v357
        %519 = vmatprep.subr.mxu0 %v363
        %520 = vmatpush1.msra.mxu0 %v362
        %521 = vmatprep.subr.mxu0 %v368
        %522 = vmatpush1.msra.mxu0 %v367
        %523 = vmatprep.mubr.f32.mxu0 %v203
        %524 = vmatmul.mubr.f32.gmra.mrb[0].mxu0 %v202
        %v525 = vpop.f32.mrb[0].mxu0
        %v526 = vadd.f32 0.0, %v525
        %v527 = vpop.f32.mrb[0].mxu0
        %v528 = vadd.f32 0.0, %v527
        %529 = vmatprep.mubr.f32.mxu0 %v205
        %530 = vmatmul.mubr.f32.gmra.mrb[0].mxu0 %v204
        %v531 = vpop.f32.mrb[0].mxu0
        %v532 = vadd.f32 0.0, %v531
        %v533 = vpop.f32.mrb[0].mxu0
        %v534 = vadd.f32 0.0, %v533
        %535 = vmatprep.mubr.f32.mxu0 %v207
        %536 = vmatmul.mubr.f32.gmra.mrb[0].mxu0 %v206
        %v537 = vpop.f32.mrb[0].mxu0
        %v538 = vadd.f32 0.0, %v537
        %v539 = vpop.f32.mrb[0].mxu0
        %v540 = vadd.f32 0.0, %v539
        %541 = vmatprep.mubr.f32.mxu0 %v209
        %542 = vmatmul.mubr.f32.gmra.mrb[0].mxu0 %v208
        %v543 = vpop.f32.mrb[0].mxu0
        %v544 = vadd.f32 0.0, %v543
        %v545 = vpop.f32.mrb[0].mxu0
        %v546 = vadd.f32 0.0, %v545
        %547 = vdwg.mxu0
        %548 = vmatprep.subr.mxu0 0.0
        %549 = vmatpush1.msra.mxu0 %v214
        %550 = vmatprep.subr.mxu0 0.0
        %551 = vmatpush1.msra.mxu0 %v219
        %552 = vmatprep.subr.mxu0 0.0
        %553 = vmatpush1.msra.mxu0 %v224
        %554 = vmatprep.subr.mxu0 0.0
        %555 = vmatpush1.msra.mxu0 %v229
        %556 = vmatprep.subr.mxu0 0.0
        %557 = vmatpush1.msra.mxu0 %v234
        %558 = vmatprep.subr.mxu0 0.0
        %559 = vmatpush1.msra.mxu0 %v239
        %560 = vmatprep.subr.mxu0 0.0
        %561 = vmatpush1.msra.mxu0 %v244
        %562 = vmatprep.subr.mxu0 0.0
        %563 = vmatpush1.msra.mxu0 %v249
        %564 = vmatprep.subr.mxu0 0.0
        %565 = vmatpush1.msra.mxu0 %v254
        %566 = vmatprep.subr.mxu0 0.0
        %567 = vmatpush1.msra.mxu0 %v259
        %568 = vmatprep.subr.mxu0 0.0
        %569 = vmatpush1.msra.mxu0 %v264
        %570 = vmatprep.subr.mxu0 0.0
        %571 = vmatpush1.msra.mxu0 %v269
        %572 = vmatprep.subr.mxu0 0.0
        %573 = vmatpush1.msra.mxu0 %v274
        %574 = vmatprep.subr.mxu0 0.0
        %575 = vmatpush1.msra.mxu0 %v279
        %576 = vmatprep.subr.mxu0 0.0
        %577 = vmatpush1.msra.mxu0 %v284
        %578 = vmatprep.subr.mxu0 0.0
        %579 = vmatpush1.msra.mxu0 %v289
        %580 = vmatprep.subr.mxu0 0.0
        %581 = vmatpush1.msra.mxu0 %v294
        %582 = vmatprep.subr.mxu0 0.0
        %583 = vmatpush1.msra.mxu0 %v299
        %584 = vmatprep.subr.mxu0 0.0
        %585 = vmatpush1.msra.mxu0 %v304
        %586 = vmatprep.subr.mxu0 0.0
        %587 = vmatpush1.msra.mxu0 %v309
        %588 = vmatprep.subr.mxu0 0.0
        %589 = vmatpush1.msra.mxu0 %v314
        %590 = vmatprep.subr.mxu0 0.0
        %591 = vmatpush1.msra.mxu0 %v319
        %592 = vmatprep.subr.mxu0 0.0
        %593 = vmatpush1.msra.mxu0 %v324
        %594 = vmatprep.subr.mxu0 0.0
        %595 = vmatpush1.msra.mxu0 %v329
        %596 = vmatprep.subr.mxu0 0.0
        %597 = vmatpush1.msra.mxu0 %v334
        %598 = vmatprep.subr.mxu0 0.0
        %599 = vmatpush1.msra.mxu0 %v339
        %600 = vmatprep.subr.mxu0 0.0
        %601 = vmatpush1.msra.mxu0 %v344
        %602 = vmatprep.subr.mxu0 0.0
        %603 = vmatpush1.msra.mxu0 %v349
        %604 = vmatprep.subr.mxu0 0.0
        %605 = vmatpush1.msra.mxu0 %v354
        %606 = vmatprep.subr.mxu0 0.0
        %607 = vmatpush1.msra.mxu0 %v359
        %608 = vmatprep.subr.mxu0 0.0
        %609 = vmatpush1.msra.mxu0 %v364
        %610 = vmatprep.subr.mxu0 0.0
        %611 = vmatpush1.msra.mxu0 %v369
        %612 = vmatprep.mubr.f32.mxu0 %v203
        %613 = vmatmul.mubr.f32.gmra.mrb[0].mxu0 %v202
        %v614 = vpop.f32.mrb[0].mxu0
        %v615 = vadd.f32 0.0, %v614
        %v616 = vpop.f32.mrb[0].mxu0
        %617 = vmatprep.mubr.f32.mxu0 %v205
        %618 = vmatmul.mubr.f32.gmra.mrb[0].mxu0 %v204
        %v619 = vpop.f32.mrb[0].mxu0
        %v620 = vadd.f32 0.0, %v619
        %v621 = vpop.f32.mrb[0].mxu0
        %622 = vmatprep.mubr.f32.mxu0 %v207
        %623 = vmatmul.mubr.f32.gmra.mrb[0].mxu0 %v206
        %v624 = vpop.f32.mrb[0].mxu0
        %v625 = vadd.f32 0.0, %v624
        %v626 = vpop.f32.mrb[0].mxu0
        %627 = vmatprep.mubr.f32.mxu0 %v209
        %628 = vmatmul.mubr.f32.gmra.mrb[0].mxu0 %v208
        %v629 = vpop.f32.mrb[0].mxu0
        %v630 = vadd.f32 0.0, %v629
        %v631 = vpop.f32.mrb[0].mxu0
        %632 = vdwg.mxu0
        %633 = vst [vmem:[%s199] sm:$0xff] %v437
        %634 = vst [vmem:[%s199 + $0x8] sm:$0xff] %v439
        %635 = vst [vmem:[%s199 + $0x10] sm:$0xff] %v526
        %636 = vst [vmem:[%s199 + $0x18] sm:$0xff] %v528
        %637 = vst [vmem:[%s199 + $0x20] sm:$0xff] %v615
        %638 = vst [vmem:[%s199 + $0x28] sm:$0xff] %v443
        %639 = vst [vmem:[%s199 + $0x30] sm:$0xff] %v445
        %640 = vst [vmem:[%s199 + $0x38] sm:$0xff] %v532
        %641 = vst [vmem:[%s199 + $0x40] sm:$0xff] %v534
        %642 = vst [vmem:[%s199 + $0x48] sm:$0xff] %v620
        %643 = vst [vmem:[%s199 + $0x50] sm:$0xff] %v449
        %644 = vst [vmem:[%s199 + $0x58] sm:$0xff] %v451
        %645 = vst [vmem:[%s199 + $0x60] sm:$0xff] %v538
        %646 = vst [vmem:[%s199 + $0x68] sm:$0xff] %v540
        %647 = vst [vmem:[%s199 + $0x70] sm:$0xff] %v625
        %648 = vst [vmem:[%s199 + $0x78] sm:$0xff] %v455
        %649 = vst [vmem:[%s199 + $0x80] sm:$0xff] %v457
        %650 = vst [vmem:[%s199 + $0x88] sm:$0xff] %v544
        %651 = vst [vmem:[%s199 + $0x90] sm:$0xff] %v546
        %652 = vst [vmem:[%s199 + $0x98] sm:$0xff] %v630
        %s653 = sand.u32 %s94, 1
        %s654 = scalar_lea.sflag [#allocation4], %s653
        %s655 = sand.u32 %s94, 1
        %s656 = smul.addr %s655, 160
        %s657 = scalar_lea.vmem [#allocation7], %s656
        // Predicated region
        $region37: #{tpu_custom_call.1} parent=27 // pred_check
          %p658 = pneg %p104
        $region38: #{tpu_custom_call.1} parent=27 // pred_check_branch
          %660 = sbr.rel (%p658) target = $region40
        $region39: #{tpu_custom_call.1} parent=27 // pred_region
          %s661 = smul.u32 4, %s25
          %s663 = ssub.s32 2560, 2560
          %664 = vsyncadd %s654, %s663
          %s665 = smul.addr %s661, 5
          %s666 = smul.addr %s24, 40
          %s667 = sadd.s32 %s665, %s666
          %s668 = smul.addr %s667, 128
          %s669 = scalar_lea.hbm %s2, %s668
          %s670 = sshll.u32 %s657, 4
          %s671 = int_to_ptr.vmem [resolvable:$true] %s670
          %676 = dma.vmem_to_hbm [thread:$0]  %s671, 2560, %s669, %s654, 640, 640, 40
        $region40: #{tpu_custom_call.1} parent=27 // pred_fallthru
          _
      $region28: #{tpu_custom_call.1} parent=5 // pred_fallthru
        _
      %p677 = scmp.le.s32.totalorder 2, %s15
      // Predicated region
      $region41: #{tpu_custom_call.1} parent=5 // pred_check
        %p678 = pneg %p677
      $region42: #{tpu_custom_call.1} parent=5 // pred_check_branch
        %680 = sbr.rel (%p678) target = $region44
      $region43: #{tpu_custom_call.1} parent=5 // pred_region
        %s681 = ssub.s32 %s15, 2
        // Predicated region
        $region45: #{tpu_custom_call.1} parent=43 // pred_check
          %p682 = pneg %p110
        $region46: #{tpu_custom_call.1} parent=43 // pred_check_branch
          %684 = sbr.rel (%p682) target = $region48
        $region47: #{tpu_custom_call.1} parent=43 // pred_region
          %s685 = sand.u32 %s95, 1
          %s686 = scalar_lea.sflag [#allocation4], %s685
          %s687 = sand.u32 %s95, 1
          %s688 = smul.addr %s687, 160
          %s689 = scalar_lea.vmem [#allocation7], %s688
          %690 = dma.done %s686, 2560
        $region48: #{tpu_custom_call.1} parent=43 // pred_fallthru
          _
      $region44: #{tpu_custom_call.1} parent=5 // pred_fallthru
        _
    $region6: #{tpu_custom_call.1} parent=1 // loop_footer
      %s19 = sadd.s32 1, %s15
    $region7: #{tpu_custom_call.1} parent=1 // loop_footer_branch
      %14 = sbr.rel target = $region3
    $region8: #{tpu_custom_call.1} parent=1 // loop_exit
      _
    %691 = vsyncpa [#allocation3], 1
    %s692 = scalar_lea.sflag [#allocation3], 1
    %693 = vsyncpa %s692, 1
    %694 = vsyncpa [#allocation6], 1
    %695 = vsyncpa [#allocation4], 1
    %s696 = scalar_lea.sflag [#allocation4], 1
    %697 = vsyncpa %s696, 1

</llo_original>
